<compile_context>
chip_gen: v7x
topology: tpu7x:2x2x1
jax: 0.10.0
libtpu: 0.0.40
codegen_flags: <defaults>
</compile_context>

<pallas_src>
import functools

import jax
import jax.numpy as jnp
from jax.experimental import pallas as pl
from jax.experimental.pallas import tpu as pltpu

# ----------------------------- configuration --------------------------------
VOCAB_SIZE = 256
EMBED_SIZE = 32
NEG_SAMPLES = 10
BATCH = 8          # batch for (input_word, context_word) and (input_ids, other_features)
SEQ_LEN = 8        # length of input_ids
N_OTHER = 9        # other_features dim (fc1 expects 128 + 9)
HID_DS = 128       # fc_1 output
HID1 = 256         # fc1 output
HID2 = 128         # fc2 output
NUM_CLASSES = 2
DROPOUT_P = 0.3
LANE = 128         # lane-dense padded width for the fc3 output store


def _log_sigmoid(x):
    # numerically-stable log(sigmoid(x)) = min(x, 0) - log(1 + exp(-|x|))
    return jnp.minimum(x, 0.0) - jnp.log(1.0 + jnp.exp(-jnp.abs(x)))


# --------------------------- single fused kernel -----------------------------
def fused_kernel(emb_in_ref, emb_ctx_ref, emb_neg_ref, xrows_ref, other_ref,
                 wds_ref, bds_ref, w1a_ref, w1b_ref, b1_ref,
                 w2_ref, b2_ref, w3_ref, b3_ref,
                 loss_ref, xout_ref, *, batch, seq):
    # ---------------- negative-sampling loss (fully vectorized) ----------------
    emb_in = emb_in_ref[...]                                    # (B, E)
    emb_ctx = emb_ctx_ref[...]                                  # (B, E)
    emb_neg = emb_neg_ref[...]                                  # (B, NEG, E)

    pos = jnp.sum(emb_in * emb_ctx, axis=-1, keepdims=True)     # (B, 1)
    # bmm(-emb_neg, emb_in): all NEG scores in one multiply + one lane reduce.
    neg = -jnp.sum(emb_neg * emb_in[:, None, :], axis=-1)       # (B, NEG)
    noise = jnp.sum(_log_sigmoid(neg), axis=-1, keepdims=True)  # (B, 1)
    loss_ref[0] = -jnp.mean(_log_sigmoid(pos) + noise)

    # -------- deepset: relu(fc_1(.)) only on the gathered embedding rows --------
    h = jnp.dot(xrows_ref[...], wds_ref[...],
                preferred_element_type=jnp.float32) + bds_ref[...]
    h = jnp.maximum(h, 0.0)                                     # (B*L, 128)
    # permute(0,2,1).sum(axis=2) == sum over the sequence axis
    x_embed = jnp.sum(h.reshape(batch, seq, HID_DS), axis=1)    # (B, 128)

    # -------------- fc1(cat(x_embed, other)) -> fc2 -> fc3 (no ReLU) -----------
    # fc1 on the concat done as split-weight matmuls (mathematically exact).
    h1 = (jnp.dot(x_embed, w1a_ref[...], preferred_element_type=jnp.float32)
          + jnp.dot(other_ref[...], w1b_ref[...], preferred_element_type=jnp.float32)
          + b1_ref[...])                                        # (B, 256)
    h2 = jnp.dot(h1, w2_ref[...], preferred_element_type=jnp.float32) + b2_ref[...]
    # fc3 weight/bias are zero-padded to 128 output lanes -> lane-dense store;
    # columns >= NUM_CLASSES are zero and sliced off in glue.
    xout_ref[...] = (jnp.dot(h2, w3_ref[...], preferred_element_type=jnp.float32)
                     + b3_ref[...])                             # (B, 128)


def fused_forward(emb_input, emb_context, emb_negative, x_rows, other_features, params):
    b = other_features.shape[0]
    seq = x_rows.shape[0] // b
    loss, x_pad = pl.pallas_call(
        functools.partial(fused_kernel, batch=b, seq=seq),
        out_shape=(jax.ShapeDtypeStruct((1,), jnp.float32),        # total_loss
                   jax.ShapeDtypeStruct((b, LANE), jnp.float32)),  # padded logits
        in_specs=[pl.BlockSpec(memory_space=pltpu.MemorySpace.VMEM)] * 14,
        out_specs=(pl.BlockSpec(memory_space=pltpu.MemorySpace.SMEM),
                   pl.BlockSpec(memory_space=pltpu.MemorySpace.VMEM)),
    )(emb_input, emb_context, emb_negative, x_rows, other_features,
      params["w_fc_1"], params["b_fc_1"],
      params["w_fc1_a"], params["w_fc1_b"], params["b_fc1"],
      params["w_fc2"], params["b_fc2"],
      params["w_fc3_pad"], params["b_fc3_pad"])
    return loss[0], x_pad[:, :NUM_CLASSES]


# ------------------------------ parameter init -------------------------------
def init_params(key):
    ks = jax.random.split(key, 10)

    def lin(kw, kb, fan_in, fan_out):
        # mimic PyTorch default nn.Linear init: U(-1/sqrt(fan_in), 1/sqrt(fan_in))
        bound = 1.0 / jnp.sqrt(float(fan_in))
        w = jax.random.uniform(kw, (fan_in, fan_out), jnp.float32, -bound, bound)
        b = jax.random.uniform(kb, (1, fan_out), jnp.float32, -bound, bound)
        return w, b

    p = {}
    p["w_emb_in"] = jax.random.uniform(ks[0], (VOCAB_SIZE, EMBED_SIZE), jnp.float32, -1.0, 1.0)
    p["w_emb_ctx"] = jax.random.uniform(ks[1], (VOCAB_SIZE, EMBED_SIZE), jnp.float32, -1.0, 1.0)
    p["w_fc_1"], p["b_fc_1"] = lin(ks[2], ks[3], EMBED_SIZE, HID_DS)          # (E, 128)
    w_fc1, p["b_fc1"] = lin(ks[4], ks[5], HID_DS + N_OTHER, HID1)             # (137, 256)
    p["w_fc1_a"] = w_fc1[:HID_DS]                                             # (128, 256)
    p["w_fc1_b"] = w_fc1[HID_DS:]                                             # (9, 256)
    p["w_fc2"], p["b_fc2"] = lin(ks[6], ks[7], HID1, HID2)                    # (256, 128)
    w_fc3, b_fc3 = lin(ks[8], ks[9], HID2, NUM_CLASSES)                       # (128, 2)
    # zero-pad fc3 to 128 output lanes for a lane-dense store in the kernel
    p["w_fc3_pad"] = jnp.pad(w_fc3, ((0, 0), (0, LANE - NUM_CLASSES)))        # (128, 128)
    p["b_fc3_pad"] = jnp.pad(b_fc3, ((0, 0), (0, LANE - NUM_CLASSES)))        # (1, 128)
    return p


# ------------------------------ forward (glue) -------------------------------
@jax.jit
def word2vec_forward(params, input_word, context_word, input_ids, other_features, rng):
    k_neg, k_drop = jax.random.split(rng)

    # embedding gathers (glue)
    emb_input = params["w_emb_in"][input_word]                # (B, E)
    emb_context = params["w_emb_ctx"][context_word]           # (B, E)

    # torch.multinomial(ones(V), B*NEG, replacement=True) == uniform int sampling
    neg_ids = jax.random.randint(k_neg, (context_word.shape[0], NEG_SAMPLES), 0, VOCAB_SIZE)
    emb_negative = params["w_emb_ctx"][neg_ids]               # (B, NEG, E)

    # ds_embedding(input_ids): only the gathered rows are needed since
    # relu(fc_1(W))[ids] == relu(fc_1(W[ids])); gather the raw rows here (glue),
    # fc_1 + relu + pooling + MLP happen inside the fused kernel.
    x_rows = params["w_emb_in"][input_ids.reshape(-1)]        # (B*L, E)

    total_loss, x = fused_forward(
        emb_input, emb_context, emb_negative, x_rows, other_features, params)

    # training-mode dropout(p=0.3) on the fc3 output with inverted scaling
    # (matches reference placement: x = dropout(fc3(x))).
    keep = jax.random.bernoulli(k_drop, 1.0 - DROPOUT_P, x.shape)
    x = jnp.where(keep, x / (1.0 - DROPOUT_P), 0.0)

    return total_loss, x


# ----------------------------------- main ------------------------------------
if __name__ == "__main__":
    key = jax.random.PRNGKey(0)
    k_params, k_iw, k_cw, k_ids, k_feat, k_run = jax.random.split(key, 6)

    params = init_params(k_params)

    input_word = jax.random.randint(k_iw, (BATCH,), 0, VOCAB_SIZE)
    context_word = jax.random.randint(k_cw, (BATCH,), 0, VOCAB_SIZE)
    input_ids = jax.random.randint(k_ids, (BATCH, SEQ_LEN), 0, VOCAB_SIZE)
    other_features = jax.random.normal(k_feat, (BATCH, N_OTHER), jnp.float32)

    total_loss, x = word2vec_forward(
        params, input_word, context_word, input_ids, other_features, k_run)
    jax.block_until_ready((total_loss, x))

    assert total_loss.shape == ()
    assert bool(jnp.isfinite(total_loss))
    assert x.shape == (BATCH, NUM_CLASSES)
    print("KERNEL_OK")
</pallas_src>

<mosaic_0001>
module attributes {stable_mosaic.version = 11 : i64} {
  func.func @fused_kernel(%arg0: memref<8x32xf32, #tpu.memory_space<vmem>>, %arg1: memref<8x32xf32, #tpu.memory_space<vmem>>, %arg2: memref<8x10x32xf32, #tpu.memory_space<vmem>>, %arg3: memref<64x32xf32, #tpu.memory_space<vmem>>, %arg4: memref<8x9xf32, #tpu.memory_space<vmem>>, %arg5: memref<32x128xf32, #tpu.memory_space<vmem>>, %arg6: memref<1x128xf32, #tpu.memory_space<vmem>>, %arg7: memref<128x256xf32, #tpu.memory_space<vmem>>, %arg8: memref<9x256xf32, #tpu.memory_space<vmem>>, %arg9: memref<1x256xf32, #tpu.memory_space<vmem>>, %arg10: memref<256x128xf32, #tpu.memory_space<vmem>>, %arg11: memref<1x128xf32, #tpu.memory_space<vmem>>, %arg12: memref<128x128xf32, #tpu.memory_space<vmem>>, %arg13: memref<1x128xf32, #tpu.memory_space<vmem>>, %arg14: memref<1xf32, #tpu.memory_space<smem>>, %arg15: memref<8x128xf32, #tpu.memory_space<vmem>>) attributes {dimension_semantics = [], scalar_prefetch = 0 : i64, scratch_operands = 0 : i64, tpu.core_type = #tpu.core_type<tc>} {
    %c0 = arith.constant 0 : index
    %c0_0 = arith.constant 0 : index
    %0 = vector.load %arg0[%c0, %c0_0] : memref<8x32xf32, #tpu.memory_space<vmem>>, vector<8x32xf32>
    %c0_1 = arith.constant 0 : index
    %c0_2 = arith.constant 0 : index
    %1 = vector.load %arg1[%c0_1, %c0_2] : memref<8x32xf32, #tpu.memory_space<vmem>>, vector<8x32xf32>
    %c0_3 = arith.constant 0 : index
    %c0_4 = arith.constant 0 : index
    %c0_5 = arith.constant 0 : index
    %2 = vector.load %arg2[%c0_3, %c0_4, %c0_5] : memref<8x10x32xf32, #tpu.memory_space<vmem>>, vector<8x10x32xf32>
    %3 = arith.mulf %0, %1 : vector<8x32xf32>
    %cst = arith.constant dense<0.000000e+00> : vector<8xf32>
    %4 = vector.multi_reduction <add>, %3, %cst [1] : vector<8x32xf32> to vector<8xf32>
    %5 = vector.shape_cast %4 : vector<8xf32> to vector<8x1xf32>
    %6 = vector.shape_cast %0 : vector<8x32xf32> to vector<8x1x32xf32>
    %7 = vector.broadcast %6 : vector<8x1x32xf32> to vector<8x10x32xf32>
    %8 = arith.mulf %2, %7 : vector<8x10x32xf32>
    %cst_6 = arith.constant dense<0.000000e+00> : vector<8x10xf32>
    %9 = vector.multi_reduction <add>, %8, %cst_6 [2] : vector<8x10x32xf32> to vector<8x10xf32>
    %cst_7 = arith.constant 0.000000e+00 : f32
    %10 = vector.broadcast %cst_7 : f32 to vector<8x10xf32>
    %11 = arith.subf %10, %9 : vector<8x10xf32>
    %cst_8 = arith.constant 0.000000e+00 : f32
    %12 = vector.broadcast %cst_8 : f32 to vector<8x10xf32>
    %13 = arith.minimumf %11, %12 : vector<8x10xf32>
    %14 = math.absf %11 : vector<8x10xf32>
    %cst_9 = arith.constant 0.000000e+00 : f32
    %15 = vector.broadcast %cst_9 : f32 to vector<8x10xf32>
    %16 = arith.subf %15, %14 : vector<8x10xf32>
    %17 = math.exp %16 : vector<8x10xf32>
    %cst_10 = arith.constant 1.000000e+00 : f32
    %18 = vector.broadcast %cst_10 : f32 to vector<8x10xf32>
    %19 = arith.addf %18, %17 : vector<8x10xf32>
    %20 = math.log %19 : vector<8x10xf32>
    %21 = arith.subf %13, %20 : vector<8x10xf32>
    %cst_11 = arith.constant dense<0.000000e+00> : vector<8xf32>
    %22 = vector.multi_reduction <add>, %21, %cst_11 [1] : vector<8x10xf32> to vector<8xf32>
    %23 = vector.shape_cast %22 : vector<8xf32> to vector<8x1xf32>
    %cst_12 = arith.constant 0.000000e+00 : f32
    %24 = vector.broadcast %cst_12 : f32 to vector<8x1xf32>
    %25 = arith.minimumf %5, %24 : vector<8x1xf32>
    %26 = math.absf %5 : vector<8x1xf32>
    %cst_13 = arith.constant 0.000000e+00 : f32
    %27 = vector.broadcast %cst_13 : f32 to vector<8x1xf32>
    %28 = arith.subf %27, %26 : vector<8x1xf32>
    %29 = math.exp %28 : vector<8x1xf32>
    %cst_14 = arith.constant 1.000000e+00 : f32
    %30 = vector.broadcast %cst_14 : f32 to vector<8x1xf32>
    %31 = arith.addf %30, %29 : vector<8x1xf32>
    %32 = math.log %31 : vector<8x1xf32>
    %33 = arith.subf %25, %32 : vector<8x1xf32>
    %34 = arith.addf %33, %23 : vector<8x1xf32>
    %35 = vector.shape_cast %34 : vector<8x1xf32> to vector<1x8x1xf32>
    %cst_15 = arith.constant dense<0.000000e+00> : vector<1xf32>
    %36 = vector.multi_reduction <add>, %35, %cst_15 [1, 2] : vector<1x8x1xf32> to vector<1xf32>
    %37 = vector.shape_cast %36 : vector<1xf32> to vector<1x1x1xf32>
    %38 = vector.extract %37[0, 0, 0] : f32 from vector<1x1x1xf32>
    %cst_16 = arith.constant 8.000000e+00 : f32
    %39 = arith.divf %38, %cst_16 : f32
    %cst_17 = arith.constant 0.000000e+00 : f32
    %40 = arith.subf %cst_17, %39 : f32
    %c0_18 = arith.constant 0 : index
    %41 = memref.load %arg14[%c0_18] : memref<1xf32, #tpu.memory_space<smem>>
    memref.store %40, %arg14[%c0_18] : memref<1xf32, #tpu.memory_space<smem>>
    %c0_19 = arith.constant 0 : index
    %c0_20 = arith.constant 0 : index
    %42 = vector.load %arg3[%c0_19, %c0_20] : memref<64x32xf32, #tpu.memory_space<vmem>>, vector<64x32xf32>
    %c0_21 = arith.constant 0 : index
    %c0_22 = arith.constant 0 : index
    %43 = vector.load %arg5[%c0_21, %c0_22] : memref<32x128xf32, #tpu.memory_space<vmem>>, vector<32x128xf32>
    %cst_23 = arith.constant dense<0.000000e+00> : vector<64x128xf32>
    %44 = tpu.matmul %42, %43, %cst_23 {dimension_numbers = #tpu.dot_dimension_numbers<[1], [0], [0], [1], [0, 0, 1, 1], [], []>} : vector<64x32xf32>, vector<32x128xf32>, vector<64x128xf32> -> vector<64x128xf32>
    %c0_24 = arith.constant 0 : index
    %c0_25 = arith.constant 0 : index
    %45 = vector.load %arg6[%c0_24, %c0_25] : memref<1x128xf32, #tpu.memory_space<vmem>>, vector<1x128xf32>
    %46 = vector.broadcast %45 : vector<1x128xf32> to vector<64x128xf32>
    %47 = arith.addf %44, %46 : vector<64x128xf32>
    %cst_26 = arith.constant 0.000000e+00 : f32
    %48 = vector.broadcast %cst_26 : f32 to vector<64x128xf32>
    %49 = arith.maximumf %47, %48 : vector<64x128xf32>
    %50 = vector.shape_cast %49 : vector<64x128xf32> to vector<8x8x128xf32>
    %cst_27 = arith.constant dense<0.000000e+00> : vector<8x128xf32>
    %51 = vector.multi_reduction <add>, %50, %cst_27 [1] : vector<8x8x128xf32> to vector<8x128xf32>
    %c0_28 = arith.constant 0 : index
    %c0_29 = arith.constant 0 : index
    %52 = vector.load %arg7[%c0_28, %c0_29] : memref<128x256xf32, #tpu.memory_space<vmem>>, vector<128x256xf32>
    %cst_30 = arith.constant dense<0.000000e+00> : vector<8x256xf32>
    %53 = tpu.matmul %51, %52, %cst_30 {dimension_numbers = #tpu.dot_dimension_numbers<[1], [0], [0], [1], [0, 0, 1, 1], [], []>} : vector<8x128xf32>, vector<128x256xf32>, vector<8x256xf32> -> vector<8x256xf32>
    %c0_31 = arith.constant 0 : index
    %c0_32 = arith.constant 0 : index
    %54 = vector.load %arg4[%c0_31, %c0_32] : memref<8x9xf32, #tpu.memory_space<vmem>>, vector<8x9xf32>
    %c0_33 = arith.constant 0 : index
    %c0_34 = arith.constant 0 : index
    %55 = vector.load %arg8[%c0_33, %c0_34] : memref<9x256xf32, #tpu.memory_space<vmem>>, vector<9x256xf32>
    %cst_35 = arith.constant dense<0.000000e+00> : vector<8x256xf32>
    %56 = tpu.matmul %54, %55, %cst_35 {dimension_numbers = #tpu.dot_dimension_numbers<[1], [0], [0], [1], [0, 0, 1, 1], [], []>} : vector<8x9xf32>, vector<9x256xf32>, vector<8x256xf32> -> vector<8x256xf32>
    %57 = arith.addf %53, %56 : vector<8x256xf32>
    %c0_36 = arith.constant 0 : index
    %c0_37 = arith.constant 0 : index
    %58 = vector.load %arg9[%c0_36, %c0_37] : memref<1x256xf32, #tpu.memory_space<vmem>>, vector<1x256xf32>
    %59 = vector.broadcast %58 : vector<1x256xf32> to vector<8x256xf32>
    %60 = arith.addf %57, %59 : vector<8x256xf32>
    %c0_38 = arith.constant 0 : index
    %c0_39 = arith.constant 0 : index
    %61 = vector.load %arg10[%c0_38, %c0_39] : memref<256x128xf32, #tpu.memory_space<vmem>>, vector<256x128xf32>
    %cst_40 = arith.constant dense<0.000000e+00> : vector<8x128xf32>
    %62 = tpu.matmul %60, %61, %cst_40 {dimension_numbers = #tpu.dot_dimension_numbers<[1], [0], [0], [1], [0, 0, 1, 1], [], []>} : vector<8x256xf32>, vector<256x128xf32>, vector<8x128xf32> -> vector<8x128xf32>
    %c0_41 = arith.constant 0 : index
    %c0_42 = arith.constant 0 : index
    %63 = vector.load %arg11[%c0_41, %c0_42] : memref<1x128xf32, #tpu.memory_space<vmem>>, vector<1x128xf32>
    %64 = vector.broadcast %63 : vector<1x128xf32> to vector<8x128xf32>
    %65 = arith.addf %62, %64 : vector<8x128xf32>
    %c0_43 = arith.constant 0 : index
    %c0_44 = arith.constant 0 : index
    %66 = vector.load %arg12[%c0_43, %c0_44] : memref<128x128xf32, #tpu.memory_space<vmem>>, vector<128x128xf32>
    %cst_45 = arith.constant dense<0.000000e+00> : vector<8x128xf32>
    %67 = tpu.matmul %65, %66, %cst_45 {dimension_numbers = #tpu.dot_dimension_numbers<[1], [0], [0], [1], [0, 0, 1, 1], [], []>} : vector<8x128xf32>, vector<128x128xf32>, vector<8x128xf32> -> vector<8x128xf32>
    %c0_46 = arith.constant 0 : index
    %c0_47 = arith.constant 0 : index
    %68 = vector.load %arg13[%c0_46, %c0_47] : memref<1x128xf32, #tpu.memory_space<vmem>>, vector<1x128xf32>
    %69 = vector.broadcast %68 : vector<1x128xf32> to vector<8x128xf32>
    %70 = arith.addf %67, %69 : vector<8x128xf32>
    %c0_48 = arith.constant 0 : index
    %c0_49 = arith.constant 0 : index
    %71 = vector.load %arg15[%c0_48, %c0_49] : memref<8x128xf32, #tpu.memory_space<vmem>>, vector<8x128xf32>
    tpu.vector_store %arg15[%c0_48, %c0_49], %70 {strides = array<i32>} : memref<8x128xf32, #tpu.memory_space<vmem>>, vector<8x128xf32>,
    return
  }
}

</mosaic_0001>

<llo_original>
// kernel: word2vec_forward.1
$region0: #{word2vec_forward.1}
  #allocation0 [shape = 'u32[]', space=smem, size = 0x4, offset = 0x4, fixed_abs, tag = 'smem constant byte address 0x4 - core index']
  #allocation1 [shape = 'u32[144,128]{1,0:T(1,128)}', space=vmem, size = 0x12000, scoped, tag = 'internal scratch']
  %s0 = inlined_call_operand.vmem [shape: f32[8,32], index: 0, kind: input, shape index: {}]
  %s1 = inlined_call_operand.vmem [shape: f32[8,32], index: 1, kind: input, shape index: {}]
  %s2 = inlined_call_operand.vmem [shape: f32[8,10,32], index: 2, kind: input, shape index: {}]
  %s3 = inlined_call_operand.vmem [shape: f32[64,32], index: 3, kind: input, shape index: {}]
  %s4 = inlined_call_operand.vmem [shape: f32[8,9], index: 4, kind: input, shape index: {}]
  %s5 = inlined_call_operand.vmem [shape: f32[32,128], index: 5, kind: input, shape index: {}]
  %s6 = inlined_call_operand.vmem [shape: f32[1,128], index: 6, kind: input, shape index: {}]
  %s7 = inlined_call_operand.vmem [shape: f32[128,256], index: 7, kind: input, shape index: {}]
  %s8 = inlined_call_operand.vmem [shape: f32[9,256], index: 8, kind: input, shape index: {}]
  %s9 = inlined_call_operand.vmem [shape: f32[1,256], index: 9, kind: input, shape index: {}]
  %s10 = inlined_call_operand.vmem [shape: f32[256,128], index: 10, kind: input, shape index: {}]
  %s11 = inlined_call_operand.vmem [shape: f32[1,128], index: 11, kind: input, shape index: {}]
  %s12 = inlined_call_operand.vmem [shape: f32[128,128], index: 12, kind: input, shape index: {}]
  %s13 = inlined_call_operand.vmem [shape: f32[1,128], index: 13, kind: input, shape index: {}]
  %s14 = inlined_call_operand.hbm [shape: f32[1], index: 14, kind: output, shape index: {0}]
  %s15 = inlined_call_operand.vmem [shape: f32[8,128], index: 15, kind: output, shape index: {1}]
  %16 = xla_tuple %s14, %s15
  %s17 = sld [smem:[#allocation0]]
  $region74: #{word2vec_forward.1} parent=0
    _
  %s19 = ssub.s32 1, %s17
  %s20 = scalar_select 0, %s19, %s17
  $region1: #{word2vec_forward.1} parent=0
    #allocation2 [shape = 'u8[512]{0}', space=smem, size = 0x200, scoped, tag = 'output window, operand 0, single buffered']
    #allocation3 [shape = 's32[1]{0}', space=sflag, size = 0x4, scoped, tag = 'scoped memory for word2vec_forward.1']
    %21 = vsyncpa [#allocation3], 0
    // Predicated region
    $region2: #{word2vec_forward.1} parent=1 // pred_check
      _
    $region3: #{word2vec_forward.1} parent=1 // pred_check_branch
      %23 = sbr.rel (0) target = $region5
    $region4: #{word2vec_forward.1} parent=1 // pred_region
      _
    $region5: #{word2vec_forward.1} parent=1 // pred_fallthru
      _
    // Predicated region
    $region6: #{word2vec_forward.1} parent=1 // pred_check
      _
    $region7: #{word2vec_forward.1} parent=1 // pred_check_branch
      %25 = sbr.rel (0) target = $region9
    $region8: #{word2vec_forward.1} parent=1 // pred_region
      _
    $region9: #{word2vec_forward.1} parent=1 // pred_fallthru
      _
    // Predicated region
    $region10: #{word2vec_forward.1} parent=1 // pred_check
      _
    $region11: #{word2vec_forward.1} parent=1 // pred_check_branch
      %27 = sbr.rel (0) target = $region13
    $region12: #{word2vec_forward.1} parent=1 // pred_region
      _
    $region13: #{word2vec_forward.1} parent=1 // pred_fallthru
      _
    // Predicated region
    $region14: #{word2vec_forward.1} parent=1 // pred_check
      _
    $region15: #{word2vec_forward.1} parent=1 // pred_check_branch
      %29 = sbr.rel (0) target = $region17
    $region16: #{word2vec_forward.1} parent=1 // pred_region
      _
    $region17: #{word2vec_forward.1} parent=1 // pred_fallthru
      _
    // Predicated region
    $region18: #{word2vec_forward.1} parent=1 // pred_check
      _
    $region19: #{word2vec_forward.1} parent=1 // pred_check_branch
      %31 = sbr.rel (0) target = $region21
    $region20: #{word2vec_forward.1} parent=1 // pred_region
      _
    $region21: #{word2vec_forward.1} parent=1 // pred_fallthru
      _
    // Predicated region
    $region22: #{word2vec_forward.1} parent=1 // pred_check
      _
    $region23: #{word2vec_forward.1} parent=1 // pred_check_branch
      %33 = sbr.rel (0) target = $region25
    $region24: #{word2vec_forward.1} parent=1 // pred_region
      _
    $region25: #{word2vec_forward.1} parent=1 // pred_fallthru
      _
    // Predicated region
    $region26: #{word2vec_forward.1} parent=1 // pred_check
      _
    $region27: #{word2vec_forward.1} parent=1 // pred_check_branch
      %35 = sbr.rel (0) target = $region29
    $region28: #{word2vec_forward.1} parent=1 // pred_region
      _
    $region29: #{word2vec_forward.1} parent=1 // pred_fallthru
      _
    // Predicated region
    $region30: #{word2vec_forward.1} parent=1 // pred_check
      _
    $region31: #{word2vec_forward.1} parent=1 // pred_check_branch
      %37 = sbr.rel (0) target = $region33
    $region32: #{word2vec_forward.1} parent=1 // pred_region
      _
    $region33: #{word2vec_forward.1} parent=1 // pred_fallthru
      _
    // Predicated region
    $region34: #{word2vec_forward.1} parent=1 // pred_check
      _
    $region35: #{word2vec_forward.1} parent=1 // pred_check_branch
      %39 = sbr.rel (0) target = $region37
    $region36: #{word2vec_forward.1} parent=1 // pred_region
      _
    $region37: #{word2vec_forward.1} parent=1 // pred_fallthru
      _
    // Predicated region
    $region38: #{word2vec_forward.1} parent=1 // pred_check
      _
    $region39: #{word2vec_forward.1} parent=1 // pred_check_branch
      %41 = sbr.rel (0) target = $region41
    $region40: #{word2vec_forward.1} parent=1 // pred_region
      _
    $region41: #{word2vec_forward.1} parent=1 // pred_fallthru
      _
    // Predicated region
    $region42: #{word2vec_forward.1} parent=1 // pred_check
      _
    $region43: #{word2vec_forward.1} parent=1 // pred_check_branch
      %43 = sbr.rel (0) target = $region45
    $region44: #{word2vec_forward.1} parent=1 // pred_region
      _
    $region45: #{word2vec_forward.1} parent=1 // pred_fallthru
      _
    // Predicated region
    $region46: #{word2vec_forward.1} parent=1 // pred_check
      _
    $region47: #{word2vec_forward.1} parent=1 // pred_check_branch
      %45 = sbr.rel (0) target = $region49
    $region48: #{word2vec_forward.1} parent=1 // pred_region
      _
    $region49: #{word2vec_forward.1} parent=1 // pred_fallthru
      _
    // Predicated region
    $region50: #{word2vec_forward.1} parent=1 // pred_check
      _
    $region51: #{word2vec_forward.1} parent=1 // pred_check_branch
      %47 = sbr.rel (0) target = $region53
    $region52: #{word2vec_forward.1} parent=1 // pred_region
      _
    $region53: #{word2vec_forward.1} parent=1 // pred_fallthru
      _
    // Predicated region
    $region54: #{word2vec_forward.1} parent=1 // pred_check
      _
    $region55: #{word2vec_forward.1} parent=1 // pred_check_branch
      %49 = sbr.rel (0) target = $region57
    $region56: #{word2vec_forward.1} parent=1 // pred_region
      _
    $region57: #{word2vec_forward.1} parent=1 // pred_fallthru
      _
    %v50 = vld [vmem:[%s0] sm:$0xff]
    %v51 = vld [vmem:[%s1] sm:$0xff]
    %v52 = vld [vmem:[%s2] sm:$0xff]
    %v53 = vld [vmem:[%s2 + $0x8] sm:$0x3]
    %v54 = vld [vmem:[%s2 + $0x10] sm:$0xff]
    %v55 = vld [vmem:[%s2 + $0x18] sm:$0x3]
    %v56 = vld [vmem:[%s2 + $0x20] sm:$0xff]
    %v57 = vld [vmem:[%s2 + $0x28] sm:$0x3]
    %v58 = vld [vmem:[%s2 + $0x30] sm:$0xff]
    %v59 = vld [vmem:[%s2 + $0x38] sm:$0x3]
    %v60 = vld [vmem:[%s2 + $0x40] sm:$0xff]
    %v61 = vld [vmem:[%s2 + $0x48] sm:$0x3]
    %v62 = vld [vmem:[%s2 + $0x50] sm:$0xff]
    %v63 = vld [vmem:[%s2 + $0x58] sm:$0x3]
    %v64 = vld [vmem:[%s2 + $0x60] sm:$0xff]
    %v65 = vld [vmem:[%s2 + $0x68] sm:$0x3]
    %v66 = vld [vmem:[%s2 + $0x70] sm:$0xff]
    %v67 = vld [vmem:[%s2 + $0x78] sm:$0x3]
    %v68 = vmul.f32 %v50, %v51
    %vm69 = vcmask 261120
    %v70 = vsel %vm69, %v68, 0.0
    %71 = vadd.xlane.f32.xlu0 %v70
    %v72 = vpop.xlane.xlu0 %71
    %v74 = vcombine.high %v50, %v50
    %v76 = vunpack.c.l.s4 1966171168
    %v77 = vunpack.c.0.s8 %v76
    %v78 = vlaneseq
    %v79 = vshrl.u32 %v78, 7
    %v80 = vsub.s32 %v77, %v79
    %v81 = vrot.slane %v50, %v80
    %v83 = vunpack.c.l.s4 1966171168
    %v84 = vunpack.c.0.s8 %v83
    %v85 = vlaneseq
    %v86 = vshrl.u32 %v85, 7
    %v87 = vsub.s32 %v84, %v86
    %v88 = vrot.slane %v74, %v87
    %v89 = vcombine.high %v81, %v81
    %v90 = vcombine.high %v88, %v88
    %v92 = vunpack.c.l.s4 1966171168
    %v93 = vunpack.c.0.s8 %v92
    %v94 = vlaneseq
    %v95 = vshrl.u32 %v94, 7
    %v96 = vsub.s32 %v93, %v95
    %v97 = vrot.slane %v81, %v96
    %v99 = vunpack.c.l.s4 1966171168
    %v100 = vunpack.c.0.s8 %v99
    %v101 = vlaneseq
    %v102 = vshrl.u32 %v101, 7
    %v103 = vsub.s32 %v100, %v102
    %v104 = vrot.slane %v88, %v103
    %v106 = vunpack.c.l.s4 1966171168
    %v107 = vunpack.c.0.s8 %v106
    %v108 = vlaneseq
    %v109 = vshrl.u32 %v108, 7
    %v110 = vsub.s32 %v107, %v109
    %v111 = vrot.slane %v89, %v110
    %v113 = vunpack.c.l.s4 1966171168
    %v114 = vunpack.c.0.s8 %v113
    %v115 = vlaneseq
    %v116 = vshrl.u32 %v115, 7
    %v117 = vsub.s32 %v114, %v116
    %v118 = vrot.slane %v90, %v117
    %v119 = vcombine.high %v97, %v97
    %v120 = vcombine.high %v104, %v104
    %v121 = vcombine.high %v111, %v111
    %v122 = vcombine.high %v118, %v118
    %v123 = vlaneseq
    %v124 = vshrl.u32 %v123, 7
    %v125 = vsub.s32 0, %v124
    %v126 = vrot.slane %v97, %v125
    %v127 = vlaneseq
    %v128 = vshrl.u32 %v127, 7
    %v129 = vsub.s32 0, %v128
    %v130 = vrot.slane %v111, %v129
    %v131 = vlaneseq
    %v132 = vshrl.u32 %v131, 7
    %v133 = vsub.s32 0, %v132
    %v134 = vrot.slane %v119, %v133
    %v135 = vlaneseq
    %v136 = vshrl.u32 %v135, 7
    %v137 = vsub.s32 0, %v136
    %v138 = vrot.slane %v121, %v137
    %v139 = vlaneseq
    %v140 = vshrl.u32 %v139, 7
    %v141 = vsub.s32 0, %v140
    %v142 = vrot.slane %v104, %v141
    %v143 = vlaneseq
    %v144 = vshrl.u32 %v143, 7
    %v145 = vsub.s32 0, %v144
    %v146 = vrot.slane %v118, %v145
    %v147 = vlaneseq
    %v148 = vshrl.u32 %v147, 7
    %v149 = vsub.s32 0, %v148
    %v150 = vrot.slane %v120, %v149
    %v151 = vlaneseq
    %v152 = vshrl.u32 %v151, 7
    %v153 = vsub.s32 0, %v152
    %v154 = vrot.slane %v122, %v153
    %v163 = vmul.f32 %v52, %v126
    %v164 = vmul.f32 %v53, %v126
    %v165 = vmul.f32 %v54, %v130
    %v166 = vmul.f32 %v55, %v130
    %v167 = vmul.f32 %v56, %v134
    %v168 = vmul.f32 %v57, %v134
    %v169 = vmul.f32 %v58, %v138
    %v170 = vmul.f32 %v59, %v138
    %v171 = vmul.f32 %v60, %v142
    %v172 = vmul.f32 %v61, %v142
    %v173 = vmul.f32 %v62, %v146
    %v174 = vmul.f32 %v63, %v146
    %v175 = vmul.f32 %v64, %v150
    %v176 = vmul.f32 %v65, %v150
    %v177 = vmul.f32 %v66, %v154
    %v178 = vmul.f32 %v67, %v154
    %v179 = vsel %vm69, %v163, 0.0
    %180 = vadd.xlane.f32.xlu0 %v179
    %v181 = vpop.xlane.xlu0 %180
    %vm182 = vcmask 254976
    %v183 = vsel %vm182, %v164, 0.0
    %184 = vadd.xlane.f32.xlu0 %v183
    %v185 = vpop.xlane.xlu0 %184
    %v186 = vsel %vm69, %v165, 0.0
    %187 = vadd.xlane.f32.xlu0 %v186
    %v188 = vpop.xlane.xlu0 %187
    %v189 = vsel %vm182, %v166, 0.0
    %190 = vadd.xlane.f32.xlu0 %v189
    %v191 = vpop.xlane.xlu0 %190
    %v192 = vsel %vm69, %v167, 0.0
    %193 = vadd.xlane.f32.xlu0 %v192
    %v194 = vpop.xlane.xlu0 %193
    %v195 = vsel %vm182, %v168, 0.0
    %196 = vadd.xlane.f32.xlu0 %v195
    %v197 = vpop.xlane.xlu0 %196
    %v198 = vsel %vm69, %v169, 0.0
    %199 = vadd.xlane.f32.xlu0 %v198
    %v200 = vpop.xlane.xlu0 %199
    %v201 = vsel %vm182, %v170, 0.0
    %202 = vadd.xlane.f32.xlu0 %v201
    %v203 = vpop.xlane.xlu0 %202
    %v204 = vsel %vm69, %v171, 0.0
    %205 = vadd.xlane.f32.xlu0 %v204
    %v206 = vpop.xlane.xlu0 %205
    %v207 = vsel %vm182, %v172, 0.0
    %208 = vadd.xlane.f32.xlu0 %v207
    %v209 = vpop.xlane.xlu0 %208
    %v210 = vsel %vm69, %v173, 0.0
    %211 = vadd.xlane.f32.xlu0 %v210
    %v212 = vpop.xlane.xlu0 %211
    %v213 = vsel %vm182, %v174, 0.0
    %214 = vadd.xlane.f32.xlu0 %v213
    %v215 = vpop.xlane.xlu0 %214
    %v216 = vsel %vm69, %v175, 0.0
    %217 = vadd.xlane.f32.xlu0 %v216
    %v218 = vpop.xlane.xlu0 %217
    %v219 = vsel %vm182, %v176, 0.0
    %220 = vadd.xlane.f32.xlu0 %v219
    %v221 = vpop.xlane.xlu0 %220
    %v222 = vsel %vm69, %v177, 0.0
    %223 = vadd.xlane.f32.xlu0 %v222
    %v224 = vpop.xlane.xlu0 %223
    %v225 = vsel %vm182, %v178, 0.0
    %226 = vadd.xlane.f32.xlu0 %v225
    %v227 = vpop.xlane.xlu0 %226
    %v228 = vsub.f32 0.0, %v181
    %v229 = vsub.f32 0.0, %v185
    %v230 = vsub.f32 0.0, %v188
    %v231 = vsub.f32 0.0, %v191
    %v232 = vsub.f32 0.0, %v194
    %v233 = vsub.f32 0.0, %v197
    %v234 = vsub.f32 0.0, %v200
    %v235 = vsub.f32 0.0, %v203
    %v236 = vsub.f32 0.0, %v206
    %v237 = vsub.f32 0.0, %v209
    %v238 = vsub.f32 0.0, %v212
    %v239 = vsub.f32 0.0, %v215
    %v240 = vsub.f32 0.0, %v218
    %v241 = vsub.f32 0.0, %v221
    %v242 = vsub.f32 0.0, %v224
    %v243 = vsub.f32 0.0, %v227
    %v244 = vmin.f32 %v228, 0.0
    %v245 = vmin.f32 %v229, 0.0
    %v246 = vmin.f32 %v230, 0.0
    %v247 = vmin.f32 %v231, 0.0
    %v248 = vmin.f32 %v232, 0.0
    %v249 = vmin.f32 %v233, 0.0
    %v250 = vmin.f32 %v234, 0.0
    %v251 = vmin.f32 %v235, 0.0
    %v252 = vmin.f32 %v236, 0.0
    %v253 = vmin.f32 %v237, 0.0
    %v254 = vmin.f32 %v238, 0.0
    %v255 = vmin.f32 %v239, 0.0
    %v256 = vmin.f32 %v240, 0.0
    %v257 = vmin.f32 %v241, 0.0
    %v258 = vmin.f32 %v242, 0.0
    %v259 = vmin.f32 %v243, 0.0
    %v260 = vand.u32 2147483647, %v228
    %v261 = vand.u32 2147483647, %v229
    %v262 = vand.u32 2147483647, %v230
    %v263 = vand.u32 2147483647, %v231
    %v264 = vand.u32 2147483647, %v232
    %v265 = vand.u32 2147483647, %v233
    %v266 = vand.u32 2147483647, %v234
    %v267 = vand.u32 2147483647, %v235
    %v268 = vand.u32 2147483647, %v236
    %v269 = vand.u32 2147483647, %v237
    %v270 = vand.u32 2147483647, %v238
    %v271 = vand.u32 2147483647, %v239
    %v272 = vand.u32 2147483647, %v240
    %v273 = vand.u32 2147483647, %v241
    %v274 = vand.u32 2147483647, %v242
    %v275 = vand.u32 2147483647, %v243
    %v276 = vsub.f32 0.0, %v260
    %v277 = vsub.f32 0.0, %v261
    %v278 = vsub.f32 0.0, %v262
    %v279 = vsub.f32 0.0, %v263
    %v280 = vsub.f32 0.0, %v264
    %v281 = vsub.f32 0.0, %v265
    %v282 = vsub.f32 0.0, %v266
    %v283 = vsub.f32 0.0, %v267
    %v284 = vsub.f32 0.0, %v268
    %v285 = vsub.f32 0.0, %v269
    %v286 = vsub.f32 0.0, %v270
    %v287 = vsub.f32 0.0, %v271
    %v288 = vsub.f32 0.0, %v272
    %v289 = vsub.f32 0.0, %v273
    %v290 = vsub.f32 0.0, %v274
    %v291 = vsub.f32 0.0, %v275
    %v292 = vmul.f32 %v276, 1.442695
    %v293 = vpow.pop %v292
    %v294 = vmul.f32 %v277, 1.442695
    %v295 = vpow.pop %v294
    %v296 = vmul.f32 %v278, 1.442695
    %v297 = vpow.pop %v296
    %v298 = vmul.f32 %v279, 1.442695
    %v299 = vpow.pop %v298
    %v300 = vmul.f32 %v280, 1.442695
    %v301 = vpow.pop %v300
    %v302 = vmul.f32 %v281, 1.442695
    %v303 = vpow.pop %v302
    %v304 = vmul.f32 %v282, 1.442695
    %v305 = vpow.pop %v304
    %v306 = vmul.f32 %v283, 1.442695
    %v307 = vpow.pop %v306
    %v308 = vmul.f32 %v284, 1.442695
    %v309 = vpow.pop %v308
    %v310 = vmul.f32 %v285, 1.442695
    %v311 = vpow.pop %v310
    %v312 = vmul.f32 %v286, 1.442695
    %v313 = vpow.pop %v312
    %v314 = vmul.f32 %v287, 1.442695
    %v315 = vpow.pop %v314
    %v316 = vmul.f32 %v288, 1.442695
    %v317 = vpow.pop %v316
    %v318 = vmul.f32 %v289, 1.442695
    %v319 = vpow.pop %v318
    %v320 = vmul.f32 %v290, 1.442695
    %v321 = vpow.pop %v320
    %v322 = vmul.f32 %v291, 1.442695
    %v323 = vpow.pop %v322
    %v324 = vadd.f32 %v293, 1.0
    %v325 = vadd.f32 %v295, 1.0
    %v326 = vadd.f32 %v297, 1.0
    %v327 = vadd.f32 %v299, 1.0
    %v328 = vadd.f32 %v301, 1.0
    %v329 = vadd.f32 %v303, 1.0
    %v330 = vadd.f32 %v305, 1.0
    %v331 = vadd.f32 %v307, 1.0
    %v332 = vadd.f32 %v309, 1.0
    %v333 = vadd.f32 %v311, 1.0
    %v334 = vadd.f32 %v313, 1.0
    %v335 = vadd.f32 %v315, 1.0
    %v336 = vadd.f32 %v317, 1.0
    %v337 = vadd.f32 %v319, 1.0
    %v338 = vadd.f32 %v321, 1.0
    %v339 = vadd.f32 %v323, 1.0
    %v340 = vlog2.pop %v324
    %v341 = vmul.f32 %v340, 0.6931472
    %v342 = vlog2.pop %v325
    %v343 = vmul.f32 %v342, 0.6931472
    %v344 = vlog2.pop %v326
    %v345 = vmul.f32 %v344, 0.6931472
    %v346 = vlog2.pop %v327
    %v347 = vmul.f32 %v346, 0.6931472
    %v348 = vlog2.pop %v328
    %v349 = vmul.f32 %v348, 0.6931472
    %v350 = vlog2.pop %v329
    %v351 = vmul.f32 %v350, 0.6931472
    %v352 = vlog2.pop %v330
    %v353 = vmul.f32 %v352, 0.6931472
    %v354 = vlog2.pop %v331
    %v355 = vmul.f32 %v354, 0.6931472
    %v356 = vlog2.pop %v332
    %v357 = vmul.f32 %v356, 0.6931472
    %v358 = vlog2.pop %v333
    %v359 = vmul.f32 %v358, 0.6931472
    %v360 = vlog2.pop %v334
    %v361 = vmul.f32 %v360, 0.6931472
    %v362 = vlog2.pop %v335
    %v363 = vmul.f32 %v362, 0.6931472
    %v364 = vlog2.pop %v336
    %v365 = vmul.f32 %v364, 0.6931472
    %v366 = vlog2.pop %v337
    %v367 = vmul.f32 %v366, 0.6931472
    %v368 = vlog2.pop %v338
    %v369 = vmul.f32 %v368, 0.6931472
    %v370 = vlog2.pop %v339
    %v371 = vmul.f32 %v370, 0.6931472
    %v372 = vsub.f32 %v244, %v341
    %v373 = vsub.f32 %v245, %v343
    %v374 = vsub.f32 %v246, %v345
    %v375 = vsub.f32 %v247, %v347
    %v376 = vsub.f32 %v248, %v349
    %v377 = vsub.f32 %v249, %v351
    %v378 = vsub.f32 %v250, %v353
    %v379 = vsub.f32 %v251, %v355
    %v380 = vsub.f32 %v252, %v357
    %v381 = vsub.f32 %v253, %v359
    %v382 = vsub.f32 %v254, %v361
    %v383 = vsub.f32 %v255, %v363
    %v384 = vsub.f32 %v256, %v365
    %v385 = vsub.f32 %v257, %v367
    %v386 = vsub.f32 %v258, %v369
    %v387 = vsub.f32 %v259, %v371
    %v404 = vlaneseq
    %v405 = vand.u32 %v404, 127
    %v406 = vlaneseq
    %v407 = vshrl.u32 %v406, 7
    %v408 = vsub.s32 %v405, %v407
    %v409 = vrot.slane %v372, %v408
    %v410 = vadd.s32 %v405, 4294967288
    %v411 = vlaneseq
    %v412 = vshrl.u32 %v411, 7
    %v413 = vsub.s32 %v410, %v412
    %v414 = vrot.slane %v373, %v413
    %vm415 = vcmask 130112
    %v416 = vsel %vm415, %v414, %v409
    %v417 = vlaneseq
    %v418 = vshrl.u32 %v417, 7
    %v419 = vsub.s32 %v405, %v418
    %v420 = vrot.slane %v374, %v419
    %v421 = vlaneseq
    %v422 = vshrl.u32 %v421, 7
    %v423 = vsub.s32 %v410, %v422
    %v424 = vrot.slane %v375, %v423
    %v425 = vsel %vm415, %v424, %v420
    %v426 = vlaneseq
    %v427 = vshrl.u32 %v426, 7
    %v428 = vsub.s32 %v405, %v427
    %v429 = vrot.slane %v376, %v428
    %v430 = vlaneseq
    %v431 = vshrl.u32 %v430, 7
    %v432 = vsub.s32 %v410, %v431
    %v433 = vrot.slane %v377, %v432
    %v434 = vsel %vm415, %v433, %v429
    %v435 = vlaneseq
    %v436 = vshrl.u32 %v435, 7
    %v437 = vsub.s32 %v405, %v436
    %v438 = vrot.slane %v378, %v437
    %v439 = vlaneseq
    %v440 = vshrl.u32 %v439, 7
    %v441 = vsub.s32 %v410, %v440
    %v442 = vrot.slane %v379, %v441
    %v443 = vsel %vm415, %v442, %v438
    %v444 = vlaneseq
    %v445 = vshrl.u32 %v444, 7
    %v446 = vsub.s32 %v405, %v445
    %v447 = vrot.slane %v380, %v446
    %v448 = vlaneseq
    %v449 = vshrl.u32 %v448, 7
    %v450 = vsub.s32 %v410, %v449
    %v451 = vrot.slane %v381, %v450
    %v452 = vsel %vm415, %v451, %v447
    %v453 = vlaneseq
    %v454 = vshrl.u32 %v453, 7
    %v455 = vsub.s32 %v405, %v454
    %v456 = vrot.slane %v382, %v455
    %v457 = vlaneseq
    %v458 = vshrl.u32 %v457, 7
    %v459 = vsub.s32 %v410, %v458
    %v460 = vrot.slane %v383, %v459
    %v461 = vsel %vm415, %v460, %v456
    %v462 = vlaneseq
    %v463 = vshrl.u32 %v462, 7
    %v464 = vsub.s32 %v405, %v463
    %v465 = vrot.slane %v384, %v464
    %v466 = vlaneseq
    %v467 = vshrl.u32 %v466, 7
    %v468 = vsub.s32 %v410, %v467
    %v469 = vrot.slane %v385, %v468
    %v470 = vsel %vm415, %v469, %v465
    %v471 = vlaneseq
    %v472 = vshrl.u32 %v471, 7
    %v473 = vsub.s32 %v405, %v472
    %v474 = vrot.slane %v386, %v473
    %v475 = vlaneseq
    %v476 = vshrl.u32 %v475, 7
    %v477 = vsub.s32 %v410, %v476
    %v478 = vrot.slane %v387, %v477
    %v479 = vsel %vm415, %v478, %v474
    %vm480 = vcmask 1041409
    %v481 = vsel %vm480, %v425, %v416
    %vm482 = vcmask 1042434
    %v483 = vsel %vm482, %v434, %v481
    %vm484 = vcmask 1043459
    %v485 = vsel %vm484, %v443, %v483
    %vm486 = vcmask 1044484
    %v487 = vsel %vm486, %v452, %v485
    %vm488 = vcmask 1045509
    %v489 = vsel %vm488, %v461, %v487
    %vm490 = vcmask 1046534
    %v491 = vsel %vm490, %v470, %v489
    %vm492 = vcmask 1047559
    %v493 = vsel %vm492, %v479, %v491
    %vm495 = vcmask 80896
    %v496 = vsel %vm495, %v493, 0.0
    %497 = vadd.xlane.f32.xlu0 %v496
    %v498 = vpop.xlane.xlu0 %497
    %v499 = vmin.f32 %v72, 0.0
    %v500 = vand.u32 2147483647, %v72
    %v501 = vsub.f32 0.0, %v500
    %v502 = vmul.f32 %v501, 1.442695
    %v503 = vpow.pop %v502
    %v504 = vadd.f32 %v503, 1.0
    %v505 = vlog2.pop %v504
    %v506 = vmul.f32 %v505, 0.6931472
    %v507 = vsub.f32 %v499, %v506
    %v508 = vadd.f32 %v507, %v498
    %vm509 = vcmask 7168
    %v510 = vsel %vm509, %v508, 0.0
    %511 = vadd.xlane.f32.xlu0 %v510
    %v512 = vpop.xlane.xlu0 %511
    %v513 = vrot.slane %v512, 4
    %v514 = vadd.f32 %v512, %v513
    %v515 = vrot.slane %v514, 2
    %v516 = vadd.f32 %v514, %v515
    %v517 = vrot.slane %v516, 1
    %v518 = vadd.f32 %v516, %v517
    %s519 = vtos %v518
    %v520 = vrcp.pop 8.0
    %s521 = vtos %v520
    %s522 = smul.f32 %s519, %s521
    %s523 = ssub.f32 0.0, %s522
    %s524 = scalar_lea.smem [#allocation2], 0
    %525 = sst [smem:[%s524]] %s523
    %v526 = vld [vmem:[%s3] sm:$0xff]
    %v527 = vld [vmem:[%s3 + $0x8] sm:$0xff]
    %v528 = vld [vmem:[%s3 + $0x10] sm:$0xff]
    %v529 = vld [vmem:[%s3 + $0x18] sm:$0xff]
    %v530 = vld [vmem:[%s3 + $0x20] sm:$0xff]
    %v531 = vld [vmem:[%s3 + $0x28] sm:$0xff]
    %v532 = vld [vmem:[%s3 + $0x30] sm:$0xff]
    %v533 = vld [vmem:[%s3 + $0x38] sm:$0xff]
    %v534 = vld [vmem:[%s5] sm:$0xff]
    %v535 = vld [vmem:[%s5 + $0x8] sm:$0xff]
    %v536 = vld [vmem:[%s5 + $0x10] sm:$0xff]
    %v537 = vld [vmem:[%s5 + $0x18] sm:$0xff]
    %v538 = vld [vmem:[%s6] sm:$0x1]
    %v540 = vlaneseq
    %v541 = vshrl.u32 %v540, 7
    %v542 = vsub.s32 0, %v541
    %v543 = vrot.slane %v538, %v542
    %v546 = vsel %vm69, %v526, 0
    %v549 = vsel %vm69, %v527, 0
    %v552 = vsel %vm69, %v528, 0
    %v555 = vsel %vm69, %v529, 0
    %v558 = vsel %vm69, %v530, 0
    %v561 = vsel %vm69, %v531, 0
    %v564 = vsel %vm69, %v532, 0
    %v567 = vsel %vm69, %v533, 0
    %569 = vmatprep.subr.mxu0 0.0
    %570 = vmatpush1.msra.mxu0 %v534
    %571 = vmatprep.subr.mxu0 0.0
    %572 = vmatpush1.msra.mxu0 %v535
    %573 = vmatprep.subr.mxu0 0.0
    %574 = vmatpush1.msra.mxu0 %v536
    %575 = vmatprep.subr.mxu0 0.0
    %576 = vmatpush1.msra.mxu0 %v537
    %577 = vmatprep.subr.mxu0 0.0
    %578 = vmatpush1.msra.mxu0 0.0
    %579 = vmatprep.subr.mxu0 0.0
    %580 = vmatpush1.msra.mxu0 0.0
    %581 = vmatprep.subr.mxu0 0.0
    %582 = vmatpush1.msra.mxu0 0.0
    %583 = vmatprep.subr.mxu0 0.0
    %584 = vmatpush1.msra.mxu0 0.0
    %585 = vmatprep.subr.mxu0 0.0
    %586 = vmatpush1.msra.mxu0 0.0
    %587 = vmatprep.subr.mxu0 0.0
    %588 = vmatpush1.msra.mxu0 0.0
    %589 = vmatprep.subr.mxu0 0.0
    %590 = vmatpush1.msra.mxu0 0.0
    %591 = vmatprep.subr.mxu0 0.0
    %592 = vmatpush1.msra.mxu0 0.0
    %593 = vmatprep.subr.mxu0 0.0
    %594 = vmatpush1.msra.mxu0 0.0
    %595 = vmatprep.subr.mxu0 0.0
    %596 = vmatpush1.msra.mxu0 0.0
    %597 = vmatprep.subr.mxu0 0.0
    %598 = vmatpush1.msra.mxu0 0.0
    %599 = vmatprep.subr.mxu0 0.0
    %600 = vmatpush1.msra.mxu0 0.0
    %601 = vmatprep.subr.mxu0 0.0
    %602 = vmatpush1.msra.mxu0 0.0
    %603 = vmatprep.subr.mxu0 0.0
    %604 = vmatpush1.msra.mxu0 0.0
    %605 = vmatprep.subr.mxu0 0.0
    %606 = vmatpush1.msra.mxu0 0.0
    %607 = vmatprep.subr.mxu0 0.0
    %608 = vmatpush1.msra.mxu0 0.0
    %609 = vmatprep.subr.mxu0 0.0
    %610 = vmatpush1.msra.mxu0 0.0
    %611 = vmatprep.subr.mxu0 0.0
    %612 = vmatpush1.msra.mxu0 0.0
    %613 = vmatprep.subr.mxu0 0.0
    %614 = vmatpush1.msra.mxu0 0.0
    %615 = vmatprep.subr.mxu0 0.0
    %616 = vmatpush1.msra.mxu0 0.0
    %617 = vmatprep.subr.mxu0 0.0
    %618 = vmatpush1.msra.mxu0 0.0
    %619 = vmatprep.subr.mxu0 0.0
    %620 = vmatpush1.msra.mxu0 0.0
    %621 = vmatprep.subr.mxu0 0.0
    %622 = vmatpush1.msra.mxu0 0.0
    %623 = vmatprep.subr.mxu0 0.0
    %624 = vmatpush1.msra.mxu0 0.0
    %625 = vmatprep.subr.mxu0 0.0
    %626 = vmatpush1.msra.mxu0 0.0
    %627 = vmatprep.subr.mxu0 0.0
    %628 = vmatpush1.msra.mxu0 0.0
    %629 = vmatprep.subr.mxu0 0.0
    %630 = vmatpush1.msra.mxu0 0.0
    %631 = vmatprep.subr.mxu0 0.0
    %632 = vmatpush1.msra.mxu0 0.0
    %633 = vmatprep.mubr.f32.mxu0 0.0
    %634 = vmatmul.mubr.f32.gmra.mrb[0].mxu0 %v546
    %v635 = vpop.f32.mrb[0].mxu0
    %v636 = vadd.f32 %v543, %v635
    %v637 = vpop.f32.mrb[0].mxu0
    %638 = vmatprep.mubr.f32.mxu0 0.0
    %639 = vmatmul.mubr.f32.gmra.mrb[0].mxu0 %v549
    %v640 = vpop.f32.mrb[0].mxu0
    %v641 = vadd.f32 %v543, %v640
    %v642 = vpop.f32.mrb[0].mxu0
    %643 = vmatprep.mubr.f32.mxu0 0.0
    %644 = vmatmul.mubr.f32.gmra.mrb[0].mxu0 %v552
    %v645 = vpop.f32.mrb[0].mxu0
    %v646 = vadd.f32 %v543, %v645
    %v647 = vpop.f32.mrb[0].mxu0
    %648 = vmatprep.mubr.f32.mxu0 0.0
    %649 = vmatmul.mubr.f32.gmra.mrb[0].mxu0 %v555
    %v650 = vpop.f32.mrb[0].mxu0
    %v651 = vadd.f32 %v543, %v650
    %v652 = vpop.f32.mrb[0].mxu0
    %653 = vmatprep.mubr.f32.mxu0 0.0
    %654 = vmatmul.mubr.f32.gmra.mrb[0].mxu0 %v558
    %v655 = vpop.f32.mrb[0].mxu0
    %v656 = vadd.f32 %v543, %v655
    %v657 = vpop.f32.mrb[0].mxu0
    %658 = vmatprep.mubr.f32.mxu0 0.0
    %659 = vmatmul.mubr.f32.gmra.mrb[0].mxu0 %v561
    %v660 = vpop.f32.mrb[0].mxu0
    %v661 = vadd.f32 %v543, %v660
    %v662 = vpop.f32.mrb[0].mxu0
    %663 = vmatprep.mubr.f32.mxu0 0.0
    %664 = vmatmul.mubr.f32.gmra.mrb[0].mxu0 %v564
    %v665 = vpop.f32.mrb[0].mxu0
    %v666 = vadd.f32 %v543, %v665
    %v667 = vpop.f32.mrb[0].mxu0
    %668 = vmatprep.mubr.f32.mxu0 0.0
    %669 = vmatmul.mubr.f32.gmra.mrb[0].mxu0 %v567
    %v670 = vpop.f32.mrb[0].mxu0
    %v671 = vadd.f32 %v543, %v670
    %v672 = vpop.f32.mrb[0].mxu0
    %673 = vdwg.mxu0
    %v674 = vmax.f32 %v636, 0.0
    %v675 = vmax.f32 %v641, 0.0
    %v676 = vmax.f32 %v646, 0.0
    %v677 = vmax.f32 %v651, 0.0
    %v678 = vmax.f32 %v656, 0.0
    %v679 = vmax.f32 %v661, 0.0
    %v680 = vmax.f32 %v666, 0.0
    %v681 = vmax.f32 %v671, 0.0
    %v682 = vrot.slane %v674, 4
    %v683 = vadd.f32 %v674, %v682
    %v684 = vrot.slane %v683, 2
    %v685 = vadd.f32 %v683, %v684
    %v686 = vrot.slane %v685, 1
    %v687 = vadd.f32 %v685, %v686
    %v688 = vrot.slane %v675, 4
    %v689 = vadd.f32 %v675, %v688
    %v690 = vrot.slane %v689, 2
    %v691 = vadd.f32 %v689, %v690
    %v692 = vrot.slane %v691, 1
    %v693 = vadd.f32 %v691, %v692
    %v694 = vrot.slane %v676, 4
    %v695 = vadd.f32 %v676, %v694
    %v696 = vrot.slane %v695, 2
    %v697 = vadd.f32 %v695, %v696
    %v698 = vrot.slane %v697, 1
    %v699 = vadd.f32 %v697, %v698
    %v700 = vrot.slane %v677, 4
    %v701 = vadd.f32 %v677, %v700
    %v702 = vrot.slane %v701, 2
    %v703 = vadd.f32 %v701, %v702
    %v704 = vrot.slane %v703, 1
    %v705 = vadd.f32 %v703, %v704
    %v706 = vrot.slane %v678, 4
    %v707 = vadd.f32 %v678, %v706
    %v708 = vrot.slane %v707, 2
    %v709 = vadd.f32 %v707, %v708
    %v710 = vrot.slane %v709, 1
    %v711 = vadd.f32 %v709, %v710
    %v712 = vrot.slane %v679, 4
    %v713 = vadd.f32 %v679, %v712
    %v714 = vrot.slane %v713, 2
    %v715 = vadd.f32 %v713, %v714
    %v716 = vrot.slane %v715, 1
    %v717 = vadd.f32 %v715, %v716
    %v718 = vrot.slane %v680, 4
    %v719 = vadd.f32 %v680, %v718
    %v720 = vrot.slane %v719, 2
    %v721 = vadd.f32 %v719, %v720
    %v722 = vrot.slane %v721, 1
    %v723 = vadd.f32 %v721, %v722
    %v724 = vrot.slane %v681, 4
    %v725 = vadd.f32 %v681, %v724
    %v726 = vrot.slane %v725, 2
    %v727 = vadd.f32 %v725, %v726
    %v728 = vrot.slane %v727, 1
    %v729 = vadd.f32 %v727, %v728
    %v730 = vld [vmem:[%s7] sm:$0xff]
    %v731 = vld [vmem:[%s7 + $0x8] sm:$0xff]
    %v732 = vld [vmem:[%s7 + $0x10] sm:$0xff]
    %v733 = vld [vmem:[%s7 + $0x18] sm:$0xff]
    %v734 = vld [vmem:[%s7 + $0x20] sm:$0xff]
    %v735 = vld [vmem:[%s7 + $0x28] sm:$0xff]
    %v736 = vld [vmem:[%s7 + $0x30] sm:$0xff]
    %v737 = vld [vmem:[%s7 + $0x38] sm:$0xff]
    %v738 = vld [vmem:[%s7 + $0x40] sm:$0xff]
    %v739 = vld [vmem:[%s7 + $0x48] sm:$0xff]
    %v740 = vld [vmem:[%s7 + $0x50] sm:$0xff]
    %v741 = vld [vmem:[%s7 + $0x58] sm:$0xff]
    %v742 = vld [vmem:[%s7 + $0x60] sm:$0xff]
    %v743 = vld [vmem:[%s7 + $0x68] sm:$0xff]
    %v744 = vld [vmem:[%s7 + $0x70] sm:$0xff]
    %v745 = vld [vmem:[%s7 + $0x78] sm:$0xff]
    %v746 = vld [vmem:[%s7 + $0x80] sm:$0xff]
    %v747 = vld [vmem:[%s7 + $0x88] sm:$0xff]
    %v748 = vld [vmem:[%s7 + $0x90] sm:$0xff]
    %v749 = vld [vmem:[%s7 + $0x98] sm:$0xff]
    %v750 = vld [vmem:[%s7 + $0xa0] sm:$0xff]
    %v751 = vld [vmem:[%s7 + $0xa8] sm:$0xff]
    %v752 = vld [vmem:[%s7 + $0xb0] sm:$0xff]
    %v753 = vld [vmem:[%s7 + $0xb8] sm:$0xff]
    %v754 = vld [vmem:[%s7 + $0xc0] sm:$0xff]
    %v755 = vld [vmem:[%s7 + $0xc8] sm:$0xff]
    %v756 = vld [vmem:[%s7 + $0xd0] sm:$0xff]
    %v757 = vld [vmem:[%s7 + $0xd8] sm:$0xff]
    %v758 = vld [vmem:[%s7 + $0xe0] sm:$0xff]
    %v759 = vld [vmem:[%s7 + $0xe8] sm:$0xff]
    %v760 = vld [vmem:[%s7 + $0xf0] sm:$0xff]
    %v761 = vld [vmem:[%s7 + $0xf8] sm:$0xff]
    %v762 = vld [vmem:[%s4] sm:$0xff]
    %v763 = vld [vmem:[%s8] sm:$0xff]
    %v764 = vld [vmem:[%s8 + $0x8] sm:$0xff]
    %v765 = vld [vmem:[%s8 + $0x10] sm:$0x1]
    %v766 = vld [vmem:[%s8 + $0x18] sm:$0x1]
    %vm767 = vcmask 72704
    %v769 = vsel %vm767, %v762, 0
    %vm771 = vcmask 1040384
    %v773 = vsel %vm771, %v765, 0
    %v776 = vsel %vm771, %v766, 0
    %778 = vmatprep.subr.mxu0 %v764
    %779 = vmatpush1.msra.mxu0 %v763
    %780 = vmatprep.subr.mxu0 %v776
    %781 = vmatpush1.msra.mxu0 %v773
    %782 = vmatprep.subr.mxu0 0.0
    %783 = vmatpush1.msra.mxu0 0.0
    %784 = vmatprep.subr.mxu0 0.0
    %785 = vmatpush1.msra.mxu0 0.0
    %786 = vmatprep.subr.mxu0 0.0
    %787 = vmatpush1.msra.mxu0 0.0
    %788 = vmatprep.subr.mxu0 0.0
    %789 = vmatpush1.msra.mxu0 0.0
    %790 = vmatprep.subr.mxu0 0.0
    %791 = vmatpush1.msra.mxu0 0.0
    %792 = vmatprep.subr.mxu0 0.0
    %793 = vmatpush1.msra.mxu0 0.0
    %794 = vmatprep.subr.mxu0 0.0
    %795 = vmatpush1.msra.mxu0 0.0
    %796 = vmatprep.subr.mxu0 0.0
    %797 = vmatpush1.msra.mxu0 0.0
    %798 = vmatprep.subr.mxu0 0.0
    %799 = vmatpush1.msra.mxu0 0.0
    %800 = vmatprep.subr.mxu0 0.0
    %801 = vmatpush1.msra.mxu0 0.0
    %802 = vmatprep.subr.mxu0 0.0
    %803 = vmatpush1.msra.mxu0 0.0
    %804 = vmatprep.subr.mxu0 0.0
    %805 = vmatpush1.msra.mxu0 0.0
    %806 = vmatprep.subr.mxu0 0.0
    %807 = vmatpush1.msra.mxu0 0.0
    %808 = vmatprep.subr.mxu0 0.0
    %809 = vmatpush1.msra.mxu0 0.0
    %810 = vmatprep.subr.mxu0 0.0
    %811 = vmatpush1.msra.mxu0 0.0
    %812 = vmatprep.subr.mxu0 0.0
    %813 = vmatpush1.msra.mxu0 0.0
    %814 = vmatprep.subr.mxu0 0.0
    %815 = vmatpush1.msra.mxu0 0.0
    %816 = vmatprep.subr.mxu0 0.0
    %817 = vmatpush1.msra.mxu0 0.0
    %818 = vmatprep.subr.mxu0 0.0
    %819 = vmatpush1.msra.mxu0 0.0
    %820 = vmatprep.subr.mxu0 0.0
    %821 = vmatpush1.msra.mxu0 0.0
    %822 = vmatprep.subr.mxu0 0.0
    %823 = vmatpush1.msra.mxu0 0.0
    %824 = vmatprep.subr.mxu0 0.0
    %825 = vmatpush1.msra.mxu0 0.0
    %826 = vmatprep.subr.mxu0 0.0
    %827 = vmatpush1.msra.mxu0 0.0
    %828 = vmatprep.subr.mxu0 0.0
    %829 = vmatpush1.msra.mxu0 0.0
    %830 = vmatprep.subr.mxu0 0.0
    %831 = vmatpush1.msra.mxu0 0.0
    %832 = vmatprep.subr.mxu0 0.0
    %833 = vmatpush1.msra.mxu0 0.0
    %834 = vmatprep.subr.mxu0 0.0
    %835 = vmatpush1.msra.mxu0 0.0
    %836 = vmatprep.subr.mxu0 0.0
    %837 = vmatpush1.msra.mxu0 0.0
    %838 = vmatprep.subr.mxu0 0.0
    %839 = vmatpush1.msra.mxu0 0.0
    %840 = vmatprep.subr.mxu0 0.0
    %841 = vmatpush1.msra.mxu0 0.0
    %842 = vmatprep.mubr.f32.mxu0 0.0
    %843 = vmatmul.mubr.f32.gmra.mrb[0].mxu0 %v769
    %v844 = vpop.f32.mrb[0].mxu0
    %v845 = vadd.f32 0.0, %v844
    %v846 = vpop.f32.mrb[0].mxu0
    %v847 = vadd.f32 0.0, %v846
    %848 = vdwg.mxu0
    %v857 = vsel %vm480, %v693, %v687
    %v858 = vsel %vm482, %v699, %v857
    %v859 = vsel %vm484, %v705, %v858
    %v860 = vsel %vm486, %v711, %v859
    %v861 = vsel %vm488, %v717, %v860
    %v862 = vsel %vm490, %v723, %v861
    %v863 = vsel %vm492, %v729, %v862
    %865 = vmatprep.subr.mxu0 %v731
    %866 = vmatpush1.msra.mxu0 %v730
    %867 = vmatprep.subr.mxu0 %v733
    %868 = vmatpush1.msra.mxu0 %v732
    %869 = vmatprep.subr.mxu0 %v735
    %870 = vmatpush1.msra.mxu0 %v734
    %871 = vmatprep.subr.mxu0 %v737
    %872 = vmatpush1.msra.mxu0 %v736
    %873 = vmatprep.subr.mxu0 %v739
    %874 = vmatpush1.msra.mxu0 %v738
    %875 = vmatprep.subr.mxu0 %v741
    %876 = vmatpush1.msra.mxu0 %v740
    %877 = vmatprep.subr.mxu0 %v743
    %878 = vmatpush1.msra.mxu0 %v742
    %879 = vmatprep.subr.mxu0 %v745
    %880 = vmatpush1.msra.mxu0 %v744
    %881 = vmatprep.subr.mxu0 %v747
    %882 = vmatpush1.msra.mxu0 %v746
    %883 = vmatprep.subr.mxu0 %v749
    %884 = vmatpush1.msra.mxu0 %v748
    %885 = vmatprep.subr.mxu0 %v751
    %886 = vmatpush1.msra.mxu0 %v750
    %887 = vmatprep.subr.mxu0 %v753
    %888 = vmatpush1.msra.mxu0 %v752
    %889 = vmatprep.subr.mxu0 %v755
    %890 = vmatpush1.msra.mxu0 %v754
    %891 = vmatprep.subr.mxu0 %v757
    %892 = vmatpush1.msra.mxu0 %v756
    %893 = vmatprep.subr.mxu0 %v759
    %894 = vmatpush1.msra.mxu0 %v758
    %895 = vmatprep.subr.mxu0 %v761
    %896 = vmatpush1.msra.mxu0 %v760
    %897 = vmatprep.subr.mxu0 0.0
    %898 = vmatpush1.msra.mxu0 0.0
    %899 = vmatprep.subr.mxu0 0.0
    %900 = vmatpush1.msra.mxu0 0.0
    %901 = vmatprep.subr.mxu0 0.0
    %902 = vmatpush1.msra.mxu0 0.0
    %903 = vmatprep.subr.mxu0 0.0
    %904 = vmatpush1.msra.mxu0 0.0
    %905 = vmatprep.subr.mxu0 0.0
    %906 = vmatpush1.msra.mxu0 0.0
    %907 = vmatprep.subr.mxu0 0.0
    %908 = vmatpush1.msra.mxu0 0.0
    %909 = vmatprep.subr.mxu0 0.0
    %910 = vmatpush1.msra.mxu0 0.0
    %911 = vmatprep.subr.mxu0 0.0
    %912 = vmatpush1.msra.mxu0 0.0
    %913 = vmatprep.subr.mxu0 0.0
    %914 = vmatpush1.msra.mxu0 0.0
    %915 = vmatprep.subr.mxu0 0.0
    %916 = vmatpush1.msra.mxu0 0.0
    %917 = vmatprep.subr.mxu0 0.0
    %918 = vmatpush1.msra.mxu0 0.0
    %919 = vmatprep.subr.mxu0 0.0
    %920 = vmatpush1.msra.mxu0 0.0
    %921 = vmatprep.subr.mxu0 0.0
    %922 = vmatpush1.msra.mxu0 0.0
    %923 = vmatprep.subr.mxu0 0.0
    %924 = vmatpush1.msra.mxu0 0.0
    %925 = vmatprep.subr.mxu0 0.0
    %926 = vmatpush1.msra.mxu0 0.0
    %927 = vmatprep.subr.mxu0 0.0
    %928 = vmatpush1.msra.mxu0 0.0
    %929 = vmatprep.mubr.f32.mxu0 0.0
    %930 = vmatmul.mubr.f32.gmra.mrb[0].mxu0 %v863
    %v931 = vpop.f32.mrb[0].mxu0
    %v932 = vadd.f32 %v845, %v931
    %v933 = vpop.f32.mrb[0].mxu0
    %v934 = vadd.f32 %v847, %v933
    %935 = vdwg.mxu0
    %v936 = vld [vmem:[%s9] sm:$0x3]
    %v938 = vlaneseq
    %v939 = vshrl.u32 %v938, 7
    %v940 = vsub.s32 0, %v939
    %v941 = vrot.slane %v936, %v940
    %v942 = vlaneseq
    %v943 = vshrl.u32 %v942, 7
    %v944 = vsub.s32 1, %v943
    %v945 = vrot.slane %v936, %v944
    %v948 = vadd.f32 %v932, %v941
    %v949 = vadd.f32 %v934, %v945
    %v950 = vld [vmem:[%s10] sm:$0xff]
    %v951 = vld [vmem:[%s10 + $0x8] sm:$0xff]
    %v952 = vld [vmem:[%s10 + $0x10] sm:$0xff]
    %v953 = vld [vmem:[%s10 + $0x18] sm:$0xff]
    %v954 = vld [vmem:[%s10 + $0x20] sm:$0xff]
    %v955 = vld [vmem:[%s10 + $0x28] sm:$0xff]
    %v956 = vld [vmem:[%s10 + $0x30] sm:$0xff]
    %v957 = vld [vmem:[%s10 + $0x38] sm:$0xff]
    %v958 = vld [vmem:[%s10 + $0x40] sm:$0xff]
    %v959 = vld [vmem:[%s10 + $0x48] sm:$0xff]
    %v960 = vld [vmem:[%s10 + $0x50] sm:$0xff]
    %v961 = vld [vmem:[%s10 + $0x58] sm:$0xff]
    %v962 = vld [vmem:[%s10 + $0x60] sm:$0xff]
    %v963 = vld [vmem:[%s10 + $0x68] sm:$0xff]
    %v964 = vld [vmem:[%s10 + $0x70] sm:$0xff]
    %v965 = vld [vmem:[%s10 + $0x78] sm:$0xff]
    %v966 = vld [vmem:[%s10 + $0x80] sm:$0xff]
    %v967 = vld [vmem:[%s10 + $0x88] sm:$0xff]
    %v968 = vld [vmem:[%s10 + $0x90] sm:$0xff]
    %v969 = vld [vmem:[%s10 + $0x98] sm:$0xff]
    %v970 = vld [vmem:[%s10 + $0xa0] sm:$0xff]
    %v971 = vld [vmem:[%s10 + $0xa8] sm:$0xff]
    %v972 = vld [vmem:[%s10 + $0xb0] sm:$0xff]
    %v973 = vld [vmem:[%s10 + $0xb8] sm:$0xff]
    %v974 = vld [vmem:[%s10 + $0xc0] sm:$0xff]
    %v975 = vld [vmem:[%s10 + $0xc8] sm:$0xff]
    %v976 = vld [vmem:[%s10 + $0xd0] sm:$0xff]
    %v977 = vld [vmem:[%s10 + $0xd8] sm:$0xff]
    %v978 = vld [vmem:[%s10 + $0xe0] sm:$0xff]
    %v979 = vld [vmem:[%s10 + $0xe8] sm:$0xff]
    %v980 = vld [vmem:[%s10 + $0xf0] sm:$0xff]
    %v981 = vld [vmem:[%s10 + $0xf8] sm:$0xff]
    %v982 = vld [vmem:[%s11] sm:$0x1]
    %v984 = vlaneseq
    %v985 = vshrl.u32 %v984, 7
    %v986 = vsub.s32 0, %v985
    %v987 = vrot.slane %v982, %v986
    %989 = vmatprep.subr.mxu0 0.0
    %990 = vmatpush1.msra.mxu0 %v950
    %991 = vmatprep.subr.mxu0 0.0
    %992 = vmatpush1.msra.mxu0 %v951
    %993 = vmatprep.subr.mxu0 0.0
    %994 = vmatpush1.msra.mxu0 %v952
    %995 = vmatprep.subr.mxu0 0.0
    %996 = vmatpush1.msra.mxu0 %v953
    %997 = vmatprep.subr.mxu0 0.0
    %998 = vmatpush1.msra.mxu0 %v954
    %999 = vmatprep.subr.mxu0 0.0
    %1000 = vmatpush1.msra.mxu0 %v955
    %1001 = vmatprep.subr.mxu0 0.0
    %1002 = vmatpush1.msra.mxu0 %v956
    %1003 = vmatprep.subr.mxu0 0.0
    %1004 = vmatpush1.msra.mxu0 %v957
    %1005 = vmatprep.subr.mxu0 0.0
    %1006 = vmatpush1.msra.mxu0 %v958
    %1007 = vmatprep.subr.mxu0 0.0
    %1008 = vmatpush1.msra.mxu0 %v959
    %1009 = vmatprep.subr.mxu0 0.0
    %1010 = vmatpush1.msra.mxu0 %v960
    %1011 = vmatprep.subr.mxu0 0.0
    %1012 = vmatpush1.msra.mxu0 %v961
    %1013 = vmatprep.subr.mxu0 0.0
    %1014 = vmatpush1.msra.mxu0 %v962
    %1015 = vmatprep.subr.mxu0 0.0
    %1016 = vmatpush1.msra.mxu0 %v963
    %1017 = vmatprep.subr.mxu0 0.0
    %1018 = vmatpush1.msra.mxu0 %v964
    %1019 = vmatprep.subr.mxu0 0.0
    %1020 = vmatpush1.msra.mxu0 %v965
    %1021 = vmatprep.subr.mxu0 0.0
    %1022 = vmatpush1.msra.mxu0 %v966
    %1023 = vmatprep.subr.mxu0 0.0
    %1024 = vmatpush1.msra.mxu0 %v967
    %1025 = vmatprep.subr.mxu0 0.0
    %1026 = vmatpush1.msra.mxu0 %v968
    %1027 = vmatprep.subr.mxu0 0.0
    %1028 = vmatpush1.msra.mxu0 %v969
    %1029 = vmatprep.subr.mxu0 0.0
    %1030 = vmatpush1.msra.mxu0 %v970
    %1031 = vmatprep.subr.mxu0 0.0
    %1032 = vmatpush1.msra.mxu0 %v971
    %1033 = vmatprep.subr.mxu0 0.0
    %1034 = vmatpush1.msra.mxu0 %v972
    %1035 = vmatprep.subr.mxu0 0.0
    %1036 = vmatpush1.msra.mxu0 %v973
    %1037 = vmatprep.subr.mxu0 0.0
    %1038 = vmatpush1.msra.mxu0 %v974
    %1039 = vmatprep.subr.mxu0 0.0
    %1040 = vmatpush1.msra.mxu0 %v975
    %1041 = vmatprep.subr.mxu0 0.0
    %1042 = vmatpush1.msra.mxu0 %v976
    %1043 = vmatprep.subr.mxu0 0.0
    %1044 = vmatpush1.msra.mxu0 %v977
    %1045 = vmatprep.subr.mxu0 0.0
    %1046 = vmatpush1.msra.mxu0 %v978
    %1047 = vmatprep.subr.mxu0 0.0
    %1048 = vmatpush1.msra.mxu0 %v979
    %1049 = vmatprep.subr.mxu0 0.0
    %1050 = vmatpush1.msra.mxu0 %v980
    %1051 = vmatprep.subr.mxu0 0.0
    %1052 = vmatpush1.msra.mxu0 %v981
    %1053 = vmatprep.mubr.f32.mxu0 %v949
    %1054 = vmatmul.mubr.f32.gmra.mrb[0].mxu0 %v948
    %v1055 = vpop.f32.mrb[0].mxu0
    %v1056 = vadd.f32 %v987, %v1055
    %v1057 = vpop.f32.mrb[0].mxu0
    %1058 = vdwg.mxu0
    %v1059 = vld [vmem:[%s12] sm:$0xff]
    %v1060 = vld [vmem:[%s12 + $0x8] sm:$0xff]
    %v1061 = vld [vmem:[%s12 + $0x10] sm:$0xff]
    %v1062 = vld [vmem:[%s12 + $0x18] sm:$0xff]
    %v1063 = vld [vmem:[%s12 + $0x20] sm:$0xff]
    %v1064 = vld [vmem:[%s12 + $0x28] sm:$0xff]
    %v1065 = vld [vmem:[%s12 + $0x30] sm:$0xff]
    %v1066 = vld [vmem:[%s12 + $0x38] sm:$0xff]
    %v1067 = vld [vmem:[%s12 + $0x40] sm:$0xff]
    %v1068 = vld [vmem:[%s12 + $0x48] sm:$0xff]
    %v1069 = vld [vmem:[%s12 + $0x50] sm:$0xff]
    %v1070 = vld [vmem:[%s12 + $0x58] sm:$0xff]
    %v1071 = vld [vmem:[%s12 + $0x60] sm:$0xff]
    %v1072 = vld [vmem:[%s12 + $0x68] sm:$0xff]
    %v1073 = vld [vmem:[%s12 + $0x70] sm:$0xff]
    %v1074 = vld [vmem:[%s12 + $0x78] sm:$0xff]
    %v1075 = vld [vmem:[%s13] sm:$0x1]
    %v1077 = vlaneseq
    %v1078 = vshrl.u32 %v1077, 7
    %v1079 = vsub.s32 0, %v1078
    %v1080 = vrot.slane %v1075, %v1079
    %1082 = vmatprep.subr.mxu0 0.0
    %1083 = vmatpush1.msra.mxu0 %v1059
    %1084 = vmatprep.subr.mxu0 0.0
    %1085 = vmatpush1.msra.mxu0 %v1060
    %1086 = vmatprep.subr.mxu0 0.0
    %1087 = vmatpush1.msra.mxu0 %v1061
    %1088 = vmatprep.subr.mxu0 0.0
    %1089 = vmatpush1.msra.mxu0 %v1062
    %1090 = vmatprep.subr.mxu0 0.0
    %1091 = vmatpush1.msra.mxu0 %v1063
    %1092 = vmatprep.subr.mxu0 0.0
    %1093 = vmatpush1.msra.mxu0 %v1064
    %1094 = vmatprep.subr.mxu0 0.0
    %1095 = vmatpush1.msra.mxu0 %v1065
    %1096 = vmatprep.subr.mxu0 0.0
    %1097 = vmatpush1.msra.mxu0 %v1066
    %1098 = vmatprep.subr.mxu0 0.0
    %1099 = vmatpush1.msra.mxu0 %v1067
    %1100 = vmatprep.subr.mxu0 0.0
    %1101 = vmatpush1.msra.mxu0 %v1068
    %1102 = vmatprep.subr.mxu0 0.0
    %1103 = vmatpush1.msra.mxu0 %v1069
    %1104 = vmatprep.subr.mxu0 0.0
    %1105 = vmatpush1.msra.mxu0 %v1070
    %1106 = vmatprep.subr.mxu0 0.0
    %1107 = vmatpush1.msra.mxu0 %v1071
    %1108 = vmatprep.subr.mxu0 0.0
    %1109 = vmatpush1.msra.mxu0 %v1072
    %1110 = vmatprep.subr.mxu0 0.0
    %1111 = vmatpush1.msra.mxu0 %v1073
    %1112 = vmatprep.subr.mxu0 0.0
    %1113 = vmatpush1.msra.mxu0 %v1074
    %1114 = vmatprep.subr.mxu0 0.0
    %1115 = vmatpush1.msra.mxu0 0.0
    %1116 = vmatprep.subr.mxu0 0.0
    %1117 = vmatpush1.msra.mxu0 0.0
    %1118 = vmatprep.subr.mxu0 0.0
    %1119 = vmatpush1.msra.mxu0 0.0
    %1120 = vmatprep.subr.mxu0 0.0
    %1121 = vmatpush1.msra.mxu0 0.0
    %1122 = vmatprep.subr.mxu0 0.0
    %1123 = vmatpush1.msra.mxu0 0.0
    %1124 = vmatprep.subr.mxu0 0.0
    %1125 = vmatpush1.msra.mxu0 0.0
    %1126 = vmatprep.subr.mxu0 0.0
    %1127 = vmatpush1.msra.mxu0 0.0
    %1128 = vmatprep.subr.mxu0 0.0
    %1129 = vmatpush1.msra.mxu0 0.0
    %1130 = vmatprep.subr.mxu0 0.0
    %1131 = vmatpush1.msra.mxu0 0.0
    %1132 = vmatprep.subr.mxu0 0.0
    %1133 = vmatpush1.msra.mxu0 0.0
    %1134 = vmatprep.subr.mxu0 0.0
    %1135 = vmatpush1.msra.mxu0 0.0
    %1136 = vmatprep.subr.mxu0 0.0
    %1137 = vmatpush1.msra.mxu0 0.0
    %1138 = vmatprep.subr.mxu0 0.0
    %1139 = vmatpush1.msra.mxu0 0.0
    %1140 = vmatprep.subr.mxu0 0.0
    %1141 = vmatpush1.msra.mxu0 0.0
    %1142 = vmatprep.subr.mxu0 0.0
    %1143 = vmatpush1.msra.mxu0 0.0
    %1144 = vmatprep.subr.mxu0 0.0
    %1145 = vmatpush1.msra.mxu0 0.0
    %1146 = vmatprep.mubr.f32.mxu0 0.0
    %1147 = vmatmul.mubr.f32.gmra.mrb[0].mxu0 %v1056
    %v1148 = vpop.f32.mrb[0].mxu0
    %v1149 = vadd.f32 %v1080, %v1148
    %v1150 = vpop.f32.mrb[0].mxu0
    %1151 = vdwg.mxu0
    %1152 = vst [vmem:[%s15] sm:$0xff] %v1149
    // Predicated region
    $region58: #{word2vec_forward.1} parent=1 // pred_check
      _
    $region59: #{word2vec_forward.1} parent=1 // pred_check_branch
      %1154 = sbr.rel (0) target = $region61
    $region60: #{word2vec_forward.1} parent=1 // pred_region
      %s1156 = ssub.s32 16, 16
      %1157 = vsyncadd [#allocation3], %s1156
      %1160 = dma.smem_to_hbm [#allocation2], 16, %s14, [#allocation3]
    $region61: #{word2vec_forward.1} parent=1 // pred_fallthru
      _
    // Predicated region
    $region62: #{word2vec_forward.1} parent=1 // pred_check
      _
    $region63: #{word2vec_forward.1} parent=1 // pred_check_branch
      %1162 = sbr.rel (0) target = $region65
    $region64: #{word2vec_forward.1} parent=1 // pred_region
      _
    $region65: #{word2vec_forward.1} parent=1 // pred_fallthru
      _
    // Predicated region
    $region66: #{word2vec_forward.1} parent=1 // pred_check
      _
    $region67: #{word2vec_forward.1} parent=1 // pred_check_branch
      %1164 = sbr.rel (0) target = $region69
    $region68: #{word2vec_forward.1} parent=1 // pred_region
      %1165 = dma.done [#allocation3], 16
    $region69: #{word2vec_forward.1} parent=1 // pred_fallthru
      _
    // Predicated region
    $region70: #{word2vec_forward.1} parent=1 // pred_check
      _
    $region71: #{word2vec_forward.1} parent=1 // pred_check_branch
      %1167 = sbr.rel (0) target = $region73
    $region72: #{word2vec_forward.1} parent=1 // pred_region
      _
    $region73: #{word2vec_forward.1} parent=1 // pred_fallthru
      _
    %1168 = sfence
    %1169 = vsyncpa [#allocation3], 1

</llo_original>
